<compile_context>
chip_gen: v7x
topology: tpu7x:2x2x1
jax: 0.10.0
libtpu: 0.0.40
codegen_flags: <defaults>
</compile_context>

<pallas_src>
import jax
import jax.numpy as jnp
from jax import lax
from jax.experimental import pallas as pl
from jax.experimental.pallas import tpu as pltpu

N_STATES = 10
N_ACTIONS = 5
N_HIDDEN = 30


def _mlp_kernel(x_ref, w1_ref, b1_ref, w2_ref, b2_ref, out_ref):
    # fc1: W1 (N_HIDDEN, N_STATES) @ x (N_STATES, B_TILE) -> (N_HIDDEN, B_TILE)
    # Weights stay in native PyTorch (out, in) layout; no transposes anywhere.
    h = lax.dot_general(
        w1_ref[...], x_ref[...],
        dimension_numbers=(((1,), (0,)), ((), ())),
        preferred_element_type=jnp.float32,
    )
    # Bias column (N_HIDDEN, 1) broadcasts over the lane (batch) axis; ReLU on
    # full vregs.  NOTE: at very large b_tile the (30, b_tile) intermediate h
    # spills to VMEM -- fine unless the vst slot saturates; if a bundle dump
    # ever shows that, chunk the lane axis with lax.fori_loop(..., unroll=True).
    h = jnp.maximum(h + b1_ref[...], 0.0)
    # out: W2 (N_ACTIONS, N_HIDDEN) @ h (N_HIDDEN, B_TILE) -> (N_ACTIONS, B_TILE)
    o = lax.dot_general(
        w2_ref[...], h,
        dimension_numbers=(((1,), (0,)), ((), ())),
        preferred_element_type=jnp.float32,
    )
    out_ref[...] = (o + b2_ref[...]).astype(out_ref.dtype)  # lane-dense store


def net_forward_t(x_t, w1, b1c, w2, b2c, *, b_tile=4096):
    """Hot-path entry point: zero wrapper-side XLA ops.

    x_t : (N_STATES, B) f32      -- activations already batch-on-lanes
    w1  : (N_HIDDEN, N_STATES)   b1c: (N_HIDDEN, 1)
    w2  : (N_ACTIONS, N_HIDDEN)  b2c: (N_ACTIONS, 1)
    returns (N_ACTIONS, B) f32   -- batch on lanes; consumer can keep it there
    """
    B = x_t.shape[1]

    if B <= b_tile:
        # Grid-less path: no grid loop, no per-step index_map scalar work.
        # Every operand is one full-array VMEM block (full dims satisfy the
        # (8, 128) block constraint).  x_t VMEM footprint: 16 x roundup(B,128)
        # f32 words -- ~0.5 MiB even at B=4096, so no vmem_limit_bytes needed
        # on any generation (v7x included).
        vmem = pl.BlockSpec(memory_space=pltpu.MemorySpace.VMEM)
        return pl.pallas_call(
            _mlp_kernel,
            out_shape=jax.ShapeDtypeStruct((N_ACTIONS, B), jnp.float32),
            in_specs=[vmem, vmem, vmem, vmem, vmem],
            out_specs=vmem,
        )(x_t, w1, b1c, w2, b2c)

    # Batch-tiled path (B > b_tile => n_tiles >= 2, so v7x's two TensorCores
    # both get work via the "parallel" batch axis).  b_tile must be a multiple
    # of 128 for lane-dense blocks.
    b_tile = max(128, ((b_tile + 127) // 128) * 128)
    n_tiles = pl.cdiv(B, b_tile)
    b_pad = n_tiles * b_tile
    if b_pad != B:
        # Remainder tile: pad with zeros (zeros flow through matmul/ReLU
        # harmlessly and the padded lanes are sliced away below).
        x_t = jnp.pad(x_t, ((0, 0), (0, b_pad - B)))

    out_t = pl.pallas_call(
        _mlp_kernel,
        out_shape=jax.ShapeDtypeStruct((N_ACTIONS, b_pad), jnp.float32),
        grid=(n_tiles,),
        in_specs=[
            # x tiled along the lane (batch) axis: long contiguous DMA rows.
            pl.BlockSpec((N_STATES, b_tile), lambda i: (0, i)),
            # Constant index_maps: weights/biases DMA'd once, VMEM-resident.
            pl.BlockSpec((N_HIDDEN, N_STATES), lambda i: (0, 0)),
            pl.BlockSpec((N_HIDDEN, 1), lambda i: (0, 0)),
            pl.BlockSpec((N_ACTIONS, N_HIDDEN), lambda i: (0, 0)),
            pl.BlockSpec((N_ACTIONS, 1), lambda i: (0, 0)),
        ],
        out_specs=pl.BlockSpec((N_ACTIONS, b_tile), lambda i: (0, i)),
        compiler_params=pltpu.CompilerParams(
            dimension_semantics=("parallel",),   # v7x: shard tiles over 2 TCs
        ),
    )(x_t, w1, b1c, w2, b2c)

    if b_pad != B:
        out_t = out_t[:, :B]
    return out_t


def net_forward(x, w1, b1, w2, b2, *, b_tile=4096):
    """PyTorch-convention wrapper: x (B, N_STATES) -> (B, N_ACTIONS).

    Adds one transpose on each side of the kernel; for the hot RL loop keep
    activations batch-on-lanes and call `net_forward_t` directly.
    """
    b1c = b1.reshape(N_HIDDEN, 1) if b1.ndim == 1 else b1
    b2c = b2.reshape(N_ACTIONS, 1) if b2.ndim == 1 else b2
    return net_forward_t(x.T, w1, b1c, w2, b2c, b_tile=b_tile).T


def init_params(key):
    """Mirror the PyTorch module: weights ~ Normal(0, 0.1);
    biases use nn.Linear's default U(-1/sqrt(fan_in), +1/sqrt(fan_in))."""
    k1, k2, k3, k4 = jax.random.split(key, 4)
    w1 = 0.1 * jax.random.normal(k1, (N_HIDDEN, N_STATES), jnp.float32)
    w2 = 0.1 * jax.random.normal(k2, (N_ACTIONS, N_HIDDEN), jnp.float32)
    bound1 = 1.0 / jnp.sqrt(N_STATES)
    bound2 = 1.0 / jnp.sqrt(N_HIDDEN)
    b1 = jax.random.uniform(k3, (N_HIDDEN,), jnp.float32, -bound1, bound1)
    b2 = jax.random.uniform(k4, (N_ACTIONS,), jnp.float32, -bound2, bound2)
    return w1, b1, w2, b2


def prepare_params(w1, b1, w2, b2):
    """One-time reshape of biases to column form (do this at init, not per call)."""
    return w1, b1.reshape(N_HIDDEN, 1), w2, b2.reshape(N_ACTIONS, 1)


def _ref(x, w1, b1, w2, b2):
    return jnp.maximum(x @ w1.T + b1, 0.0) @ w2.T + b2


if __name__ == "__main__":
    key = jax.random.PRNGKey(0)
    kx, kp = jax.random.split(key)
    w1, b1, w2, b2 = init_params(kp)
    w1k, b1c, w2k, b2c = prepare_params(w1, b1, w2, b2)

    # --- Small batch: grid-less full-block path, via both entry points. ------
    B_small = 8
    x_small = jax.random.normal(kx, (B_small, N_STATES), jnp.float32)
    ref_small = _ref(x_small, w1, b1, w2, b2)

    out_small = jax.block_until_ready(net_forward(x_small, w1, b1, w2, b2))
    assert out_small.shape == (B_small, N_ACTIONS)
    assert jnp.allclose(out_small, ref_small, atol=1e-5, rtol=1e-5)

    out_small_t = jax.block_until_ready(
        net_forward_t(x_small.T, w1k, b1c, w2k, b2c))
    assert out_small_t.shape == (N_ACTIONS, B_small)
    assert jnp.allclose(out_small_t.T, ref_small, atol=1e-5, rtol=1e-5)

    # --- Larger batch, deliberately tiny tile: exercises the batch-tiled path,
    #     remainder padding, and the "parallel" grid axis. --------------------
    B_big = 200
    x_big = jax.random.normal(kx, (B_big, N_STATES), jnp.float32)
    ref_big = _ref(x_big, w1, b1, w2, b2)
    out_big = jax.block_until_ready(
        net_forward(x_big, w1, b1, w2, b2, b_tile=128))
    assert out_big.shape == (B_big, N_ACTIONS)
    assert jnp.allclose(out_big, ref_big, atol=1e-5, rtol=1e-5)

    # --- Exact-divide tiled path (no pad / no slice emitted). ----------------
    B_div = 256
    x_div = jax.random.normal(kx, (B_div, N_STATES), jnp.float32)
    out_div = jax.block_until_ready(
        net_forward_t(x_div.T, w1k, b1c, w2k, b2c, b_tile=128))
    assert out_div.shape == (N_ACTIONS, B_div)
    assert jnp.allclose(out_div.T, _ref(x_div, w1, b1, w2, b2),
                        atol=1e-5, rtol=1e-5)

    print("KERNEL_OK")
</pallas_src>

<mosaic_0001>
module attributes {stable_mosaic.version = 11 : i64} {
  func.func @_mlp_kernel(%arg0: memref<10x8xf32, #tpu.memory_space<vmem>>, %arg1: memref<30x10xf32, #tpu.memory_space<vmem>>, %arg2: memref<30x1xf32, #tpu.memory_space<vmem>>, %arg3: memref<5x30xf32, #tpu.memory_space<vmem>>, %arg4: memref<5x1xf32, #tpu.memory_space<vmem>>, %arg5: memref<5x8xf32, #tpu.memory_space<vmem>>) attributes {dimension_semantics = [], scalar_prefetch = 0 : i64, scratch_operands = 0 : i64, tpu.core_type = #tpu.core_type<tc>} {
    %c0 = arith.constant 0 : index
    %c0_0 = arith.constant 0 : index
    %0 = vector.load %arg1[%c0, %c0_0] : memref<30x10xf32, #tpu.memory_space<vmem>>, vector<30x10xf32>
    %c0_1 = arith.constant 0 : index
    %c0_2 = arith.constant 0 : index
    %1 = vector.load %arg0[%c0_1, %c0_2] : memref<10x8xf32, #tpu.memory_space<vmem>>, vector<10x8xf32>
    %cst = arith.constant dense<0.000000e+00> : vector<30x8xf32>
    %2 = tpu.matmul %0, %1, %cst {dimension_numbers = #tpu.dot_dimension_numbers<[1], [0], [0], [1], [0, 0, 1, 1], [], []>} : vector<30x10xf32>, vector<10x8xf32>, vector<30x8xf32> -> vector<30x8xf32>
    %c0_3 = arith.constant 0 : index
    %c0_4 = arith.constant 0 : index
    %3 = vector.load %arg2[%c0_3, %c0_4] : memref<30x1xf32, #tpu.memory_space<vmem>>, vector<30x1xf32>
    %4 = vector.broadcast %3 : vector<30x1xf32> to vector<30x8xf32>
    %5 = arith.addf %2, %4 : vector<30x8xf32>
    %cst_5 = arith.constant 0.000000e+00 : f32
    %6 = vector.broadcast %cst_5 : f32 to vector<30x8xf32>
    %7 = arith.maximumf %5, %6 : vector<30x8xf32>
    %c0_6 = arith.constant 0 : index
    %c0_7 = arith.constant 0 : index
    %8 = vector.load %arg3[%c0_6, %c0_7] : memref<5x30xf32, #tpu.memory_space<vmem>>, vector<5x30xf32>
    %cst_8 = arith.constant dense<0.000000e+00> : vector<5x8xf32>
    %9 = tpu.matmul %8, %7, %cst_8 {dimension_numbers = #tpu.dot_dimension_numbers<[1], [0], [0], [1], [0, 0, 1, 1], [], []>} : vector<5x30xf32>, vector<30x8xf32>, vector<5x8xf32> -> vector<5x8xf32>
    %c0_9 = arith.constant 0 : index
    %c0_10 = arith.constant 0 : index
    %10 = vector.load %arg4[%c0_9, %c0_10] : memref<5x1xf32, #tpu.memory_space<vmem>>, vector<5x1xf32>
    %11 = vector.broadcast %10 : vector<5x1xf32> to vector<5x8xf32>
    %12 = arith.addf %9, %11 : vector<5x8xf32>
    %c0_11 = arith.constant 0 : index
    %c0_12 = arith.constant 0 : index
    %13 = vector.load %arg5[%c0_11, %c0_12] : memref<5x8xf32, #tpu.memory_space<vmem>>, vector<5x8xf32>
    tpu.vector_store %arg5[%c0_11, %c0_12], %12 {strides = array<i32>} : memref<5x8xf32, #tpu.memory_space<vmem>>, vector<5x8xf32>,
    return
  }
}

</mosaic_0001>

<llo_original>
// kernel: tpu_custom_call.1
$region0: #{tpu_custom_call.1}
  #allocation0 [shape = 'u32[]', space=smem, size = 0x4, offset = 0x4, fixed_abs, tag = 'smem constant byte address 0x4 - core index']
  #allocation1 [shape = 'u32[144,128]{1,0:T(1,128)}', space=vmem, size = 0x12000, scoped, tag = 'internal scratch']
  %s0 = inlined_call_operand.vmem [shape: f32[10,8], index: 0, kind: input, shape index: {}]
  %s1 = inlined_call_operand.vmem [shape: f32[30,10], index: 1, kind: input, shape index: {}]
  %s2 = inlined_call_operand.vmem [shape: f32[30,1], index: 2, kind: input, shape index: {}]
  %s3 = inlined_call_operand.vmem [shape: f32[5,30], index: 3, kind: input, shape index: {}]
  %s4 = inlined_call_operand.vmem [shape: f32[5,1], index: 4, kind: input, shape index: {}]
  %s5 = inlined_call_operand.hbm [shape: f32[5,8], index: 5, kind: output, shape index: {}]
  %s6 = sld [smem:[#allocation0]]
  $region30: #{tpu_custom_call.1} parent=0
    _
  %s8 = ssub.s32 1, %s6
  %s9 = scalar_select 0, %s8, %s6
  $region1: #{tpu_custom_call.1} parent=0
    #allocation2 [shape = 'u8[4096]{0}', space=vmem, size = 0x1000, scoped, tag = 'output window, operand 0, single buffered']
    #allocation3 [shape = 's32[1]{0}', space=sflag, size = 0x4, scoped, tag = 'scoped memory for tpu_custom_call.1']
    %10 = vsyncpa [#allocation3], 0
    // Predicated region
    $region2: #{tpu_custom_call.1} parent=1 // pred_check
      _
    $region3: #{tpu_custom_call.1} parent=1 // pred_check_branch
      %12 = sbr.rel (0) target = $region5
    $region4: #{tpu_custom_call.1} parent=1 // pred_region
      _
    $region5: #{tpu_custom_call.1} parent=1 // pred_fallthru
      _
    // Predicated region
    $region6: #{tpu_custom_call.1} parent=1 // pred_check
      _
    $region7: #{tpu_custom_call.1} parent=1 // pred_check_branch
      %14 = sbr.rel (0) target = $region9
    $region8: #{tpu_custom_call.1} parent=1 // pred_region
      _
    $region9: #{tpu_custom_call.1} parent=1 // pred_fallthru
      _
    // Predicated region
    $region10: #{tpu_custom_call.1} parent=1 // pred_check
      _
    $region11: #{tpu_custom_call.1} parent=1 // pred_check_branch
      %16 = sbr.rel (0) target = $region13
    $region12: #{tpu_custom_call.1} parent=1 // pred_region
      _
    $region13: #{tpu_custom_call.1} parent=1 // pred_fallthru
      _
    // Predicated region
    $region14: #{tpu_custom_call.1} parent=1 // pred_check
      _
    $region15: #{tpu_custom_call.1} parent=1 // pred_check_branch
      %18 = sbr.rel (0) target = $region17
    $region16: #{tpu_custom_call.1} parent=1 // pred_region
      _
    $region17: #{tpu_custom_call.1} parent=1 // pred_fallthru
      _
    // Predicated region
    $region18: #{tpu_custom_call.1} parent=1 // pred_check
      _
    $region19: #{tpu_custom_call.1} parent=1 // pred_check_branch
      %20 = sbr.rel (0) target = $region21
    $region20: #{tpu_custom_call.1} parent=1 // pred_region
      _
    $region21: #{tpu_custom_call.1} parent=1 // pred_fallthru
      _
    %v21 = vld [vmem:[%s1] sm:$0xff]
    %v22 = vld [vmem:[%s1 + $0x8] sm:$0xff]
    %v23 = vld [vmem:[%s1 + $0x10] sm:$0xff]
    %v24 = vld [vmem:[%s1 + $0x18] sm:$0x3f]
    %v25 = vld [vmem:[%s0] sm:$0xff]
    %v26 = vld [vmem:[%s0 + $0x8] sm:$0x3]
    %v27 = vld [vmem:[%s2] sm:$0xff]
    %v28 = vld [vmem:[%s2 + $0x8] sm:$0xff]
    %v29 = vld [vmem:[%s2 + $0x10] sm:$0xff]
    %v30 = vld [vmem:[%s2 + $0x18] sm:$0x3f]
    %32 = vset.pattern.permute.xlu0 0
    %33 = vperm.xlu0 %32, %v27
    %v34 = vpop.permute.xlu0 %33
    %37 = vset.pattern.permute.xlu0 0
    %38 = vperm.xlu0 %37, %v28
    %v39 = vpop.permute.xlu0 %38
    %42 = vset.pattern.permute.xlu0 0
    %43 = vperm.xlu0 %42, %v29
    %v44 = vpop.permute.xlu0 %43
    %47 = vset.pattern.permute.xlu0 0
    %48 = vperm.xlu0 %47, %v30
    %v49 = vpop.permute.xlu0 %48
    %vm51 = vcmask 80896
    %v53 = vsel %vm51, %v21, 0
    %v56 = vsel %vm51, %v22, 0
    %v59 = vsel %vm51, %v23, 0
    %v62 = vsel %vm51, %v24, 0
    %vm64 = vcmask 1041408
    %v66 = vsel %vm64, %v26, 0
    %68 = vmatprep.subr.mxu0 0.0
    %69 = vmatpush1.msra.mxu0 %v25
    %70 = vmatprep.subr.mxu0 0.0
    %71 = vmatpush1.msra.mxu0 %v66
    %72 = vmatprep.subr.mxu0 0.0
    %73 = vmatpush1.msra.mxu0 0.0
    %74 = vmatprep.subr.mxu0 0.0
    %75 = vmatpush1.msra.mxu0 0.0
    %76 = vmatprep.subr.mxu0 0.0
    %77 = vmatpush1.msra.mxu0 0.0
    %78 = vmatprep.subr.mxu0 0.0
    %79 = vmatpush1.msra.mxu0 0.0
    %80 = vmatprep.subr.mxu0 0.0
    %81 = vmatpush1.msra.mxu0 0.0
    %82 = vmatprep.subr.mxu0 0.0
    %83 = vmatpush1.msra.mxu0 0.0
    %84 = vmatprep.subr.mxu0 0.0
    %85 = vmatpush1.msra.mxu0 0.0
    %86 = vmatprep.subr.mxu0 0.0
    %87 = vmatpush1.msra.mxu0 0.0
    %88 = vmatprep.subr.mxu0 0.0
    %89 = vmatpush1.msra.mxu0 0.0
    %90 = vmatprep.subr.mxu0 0.0
    %91 = vmatpush1.msra.mxu0 0.0
    %92 = vmatprep.subr.mxu0 0.0
    %93 = vmatpush1.msra.mxu0 0.0
    %94 = vmatprep.subr.mxu0 0.0
    %95 = vmatpush1.msra.mxu0 0.0
    %96 = vmatprep.subr.mxu0 0.0
    %97 = vmatpush1.msra.mxu0 0.0
    %98 = vmatprep.subr.mxu0 0.0
    %99 = vmatpush1.msra.mxu0 0.0
    %100 = vmatprep.subr.mxu0 0.0
    %101 = vmatpush1.msra.mxu0 0.0
    %102 = vmatprep.subr.mxu0 0.0
    %103 = vmatpush1.msra.mxu0 0.0
    %104 = vmatprep.subr.mxu0 0.0
    %105 = vmatpush1.msra.mxu0 0.0
    %106 = vmatprep.subr.mxu0 0.0
    %107 = vmatpush1.msra.mxu0 0.0
    %108 = vmatprep.subr.mxu0 0.0
    %109 = vmatpush1.msra.mxu0 0.0
    %110 = vmatprep.subr.mxu0 0.0
    %111 = vmatpush1.msra.mxu0 0.0
    %112 = vmatprep.subr.mxu0 0.0
    %113 = vmatpush1.msra.mxu0 0.0
    %114 = vmatprep.subr.mxu0 0.0
    %115 = vmatpush1.msra.mxu0 0.0
    %116 = vmatprep.subr.mxu0 0.0
    %117 = vmatpush1.msra.mxu0 0.0
    %118 = vmatprep.subr.mxu0 0.0
    %119 = vmatpush1.msra.mxu0 0.0
    %120 = vmatprep.subr.mxu0 0.0
    %121 = vmatpush1.msra.mxu0 0.0
    %122 = vmatprep.subr.mxu0 0.0
    %123 = vmatpush1.msra.mxu0 0.0
    %124 = vmatprep.subr.mxu0 0.0
    %125 = vmatpush1.msra.mxu0 0.0
    %126 = vmatprep.subr.mxu0 0.0
    %127 = vmatpush1.msra.mxu0 0.0
    %128 = vmatprep.subr.mxu0 0.0
    %129 = vmatpush1.msra.mxu0 0.0
    %130 = vmatprep.subr.mxu0 0.0
    %131 = vmatpush1.msra.mxu0 0.0
    %132 = vmatprep.mubr.f32.mxu0 0.0
    %133 = vmatmul.mubr.f32.gmra.mrb[0].mxu0 %v53
    %v134 = vpop.f32.mrb[0].mxu0
    %v135 = vadd.f32 %v34, %v134
    %v136 = vpop.f32.mrb[0].mxu0
    %137 = vmatprep.mubr.f32.mxu0 0.0
    %138 = vmatmul.mubr.f32.gmra.mrb[0].mxu0 %v56
    %v139 = vpop.f32.mrb[0].mxu0
    %v140 = vadd.f32 %v39, %v139
    %v141 = vpop.f32.mrb[0].mxu0
    %142 = vmatprep.mubr.f32.mxu0 0.0
    %143 = vmatmul.mubr.f32.gmra.mrb[0].mxu0 %v59
    %v144 = vpop.f32.mrb[0].mxu0
    %v145 = vadd.f32 %v44, %v144
    %v146 = vpop.f32.mrb[0].mxu0
    %147 = vmatprep.mubr.f32.mxu0 0.0
    %148 = vmatmul.mubr.f32.gmra.mrb[0].mxu0 %v62
    %v149 = vpop.f32.mrb[0].mxu0
    %v150 = vadd.f32 %v49, %v149
    %v151 = vpop.f32.mrb[0].mxu0
    %152 = vdwg.mxu0
    %v153 = vmax.f32 %v135, 0.0
    %v154 = vmax.f32 %v140, 0.0
    %v155 = vmax.f32 %v145, 0.0
    %v156 = vmax.f32 %v150, 0.0
    %v157 = vld [vmem:[%s3] sm:$0x1f]
    %v158 = vld [vmem:[%s4] sm:$0x1f]
    %160 = vset.pattern.permute.xlu0 0
    %161 = vperm.xlu0 %160, %v158
    %v162 = vpop.permute.xlu0 %161
    %vm164 = vcmask 244736
    %v166 = vsel %vm164, %v157, 0
    %vm168 = vcmask 1045504
    %v170 = vsel %vm168, %v156, 0
    %172 = vmatprep.subr.mxu0 0.0
    %173 = vmatpush1.msra.mxu0 %v153
    %174 = vmatprep.subr.mxu0 0.0
    %175 = vmatpush1.msra.mxu0 %v154
    %176 = vmatprep.subr.mxu0 0.0
    %177 = vmatpush1.msra.mxu0 %v155
    %178 = vmatprep.subr.mxu0 0.0
    %179 = vmatpush1.msra.mxu0 %v170
    %180 = vmatprep.subr.mxu0 0.0
    %181 = vmatpush1.msra.mxu0 0.0
    %182 = vmatprep.subr.mxu0 0.0
    %183 = vmatpush1.msra.mxu0 0.0
    %184 = vmatprep.subr.mxu0 0.0
    %185 = vmatpush1.msra.mxu0 0.0
    %186 = vmatprep.subr.mxu0 0.0
    %187 = vmatpush1.msra.mxu0 0.0
    %188 = vmatprep.subr.mxu0 0.0
    %189 = vmatpush1.msra.mxu0 0.0
    %190 = vmatprep.subr.mxu0 0.0
    %191 = vmatpush1.msra.mxu0 0.0
    %192 = vmatprep.subr.mxu0 0.0
    %193 = vmatpush1.msra.mxu0 0.0
    %194 = vmatprep.subr.mxu0 0.0
    %195 = vmatpush1.msra.mxu0 0.0
    %196 = vmatprep.subr.mxu0 0.0
    %197 = vmatpush1.msra.mxu0 0.0
    %198 = vmatprep.subr.mxu0 0.0
    %199 = vmatpush1.msra.mxu0 0.0
    %200 = vmatprep.subr.mxu0 0.0
    %201 = vmatpush1.msra.mxu0 0.0
    %202 = vmatprep.subr.mxu0 0.0
    %203 = vmatpush1.msra.mxu0 0.0
    %204 = vmatprep.subr.mxu0 0.0
    %205 = vmatpush1.msra.mxu0 0.0
    %206 = vmatprep.subr.mxu0 0.0
    %207 = vmatpush1.msra.mxu0 0.0
    %208 = vmatprep.subr.mxu0 0.0
    %209 = vmatpush1.msra.mxu0 0.0
    %210 = vmatprep.subr.mxu0 0.0
    %211 = vmatpush1.msra.mxu0 0.0
    %212 = vmatprep.subr.mxu0 0.0
    %213 = vmatpush1.msra.mxu0 0.0
    %214 = vmatprep.subr.mxu0 0.0
    %215 = vmatpush1.msra.mxu0 0.0
    %216 = vmatprep.subr.mxu0 0.0
    %217 = vmatpush1.msra.mxu0 0.0
    %218 = vmatprep.subr.mxu0 0.0
    %219 = vmatpush1.msra.mxu0 0.0
    %220 = vmatprep.subr.mxu0 0.0
    %221 = vmatpush1.msra.mxu0 0.0
    %222 = vmatprep.subr.mxu0 0.0
    %223 = vmatpush1.msra.mxu0 0.0
    %224 = vmatprep.subr.mxu0 0.0
    %225 = vmatpush1.msra.mxu0 0.0
    %226 = vmatprep.subr.mxu0 0.0
    %227 = vmatpush1.msra.mxu0 0.0
    %228 = vmatprep.subr.mxu0 0.0
    %229 = vmatpush1.msra.mxu0 0.0
    %230 = vmatprep.subr.mxu0 0.0
    %231 = vmatpush1.msra.mxu0 0.0
    %232 = vmatprep.subr.mxu0 0.0
    %233 = vmatpush1.msra.mxu0 0.0
    %234 = vmatprep.subr.mxu0 0.0
    %235 = vmatpush1.msra.mxu0 0.0
    %236 = vmatprep.mubr.f32.mxu0 0.0
    %237 = vmatmul.mubr.f32.gmra.mrb[0].mxu0 %v166
    %v238 = vpop.f32.mrb[0].mxu0
    %v239 = vadd.f32 %v162, %v238
    %v240 = vpop.f32.mrb[0].mxu0
    %241 = vdwg.mxu0
    %vm242 = vcmask 61440
    %243 = vst.msk [vmem:[#allocation2] sm:$0x1f] %vm242, %v239
    // Predicated region
    $region22: #{tpu_custom_call.1} parent=1 // pred_check
      _
    $region23: #{tpu_custom_call.1} parent=1 // pred_check_branch
      %245 = sbr.rel (0) target = $region25
    $region24: #{tpu_custom_call.1} parent=1 // pred_region
      %s247 = ssub.s32 128, 128
      %248 = vsyncadd [#allocation3], %s247
      %s250 = sshll.u32 [#allocation2], 4
      %s251 = int_to_ptr.vmem [resolvable:$true] %s250
      %253 = dma.vmem_to_hbm [thread:$0]  %s251, 128, %s5, [#allocation3]
    $region25: #{tpu_custom_call.1} parent=1 // pred_fallthru
      _
    // Predicated region
    $region26: #{tpu_custom_call.1} parent=1 // pred_check
      _
    $region27: #{tpu_custom_call.1} parent=1 // pred_check_branch
      %255 = sbr.rel (0) target = $region29
    $region28: #{tpu_custom_call.1} parent=1 // pred_region
      %256 = dma.done [#allocation3], 128
    $region29: #{tpu_custom_call.1} parent=1 // pred_fallthru
      _
    %257 = vsyncpa [#allocation3], 1

</llo_original>
